<compile_context>
chip_gen: v6e
topology: v6e:2x2x1
jax: 0.10.0
libtpu: 0.0.40
codegen_flags: <defaults>
</compile_context>

<pallas_src>
import functools

import jax
import jax.numpy as jnp
from jax import lax
from jax.experimental import pallas as pl
from jax.experimental.pallas import tpu as pltpu


def _round_up(x, m):
    return (x + m - 1) // m * m


def _choose_tile_rows(n_rows, d):
    """Largest row tile whose double-buffered bf16 x block stays well inside VMEM
    (conservative so it also fits v7x's 64 MiB); multiple of 256 when tiled."""
    x_tile_budget = 24 << 20                      # bytes for 2x (TN, D) bf16 x buffers
    cap = x_tile_budget // (2 * d * 2)
    cap = max(8, min(1024, cap))
    if n_rows <= cap:
        return _round_up(n_rows, 8)               # single (sublane-padded) tile
    tn = (cap // 256) * 256
    if tn == 0:
        tn = (cap // 8) * 8
    return max(8, tn)


def _mlp_kernel(x_ref, w1_ref, b1_ref, w2_ref, b2_ref, w3t_ref, b3_ref, o_ref):
    # Layer 1 (MXU, bf16 x bf16 -> f32 accumulate): (TN, D) @ (D, D//4)
    h1 = jnp.dot(x_ref[...], w1_ref[...], preferred_element_type=jnp.float32)
    h1 = jnp.maximum(h1 + b1_ref[...], 0.0)
    # Layer 2 (f32): (TN, D//4) @ (D//4, D//16)
    h2 = jnp.dot(h1, w2_ref[...], preferred_element_type=jnp.float32)
    h2 = jnp.maximum(h2 + b2_ref[...], 0.0)
    # Layer 3, lane-dense: contract w3t (1, D//16) with h2 (TN, D//16) over the
    # feature axis -> (1, TN) row so the writeback is lane-major (no masked stores).
    out_row = lax.dot_general(
        w3t_ref[...], h2,
        dimension_numbers=(((1,), (1,)), ((), ())),
        preferred_element_type=jnp.float32,
    ) + b3_ref[...]
    o_ref[...] = out_row[None].astype(o_ref.dtype)          # (1, 1, TN)


@functools.partial(jax.jit, static_argnames=("embedding_dim",))
def dense_network_forward(x, params, *, embedding_dim):
    """Equivalent of DenseNetwork.forward: x.reshape(-1, D) -> MLP -> (N, 1)."""
    w1, b1, w2, b2, w3t, b3 = params
    d = embedding_dim
    x2d = x.reshape((-1, d))
    n = x2d.shape[0]

    tn = _choose_tile_rows(n, d)
    n_pad = _round_up(n, tn)
    num_tiles = n_pad // tn
    if n_pad != n:
        x2d = jnp.pad(x2d, ((0, n_pad - n), (0, 0)))

    # bf16 for the bandwidth-dominant layer-1 operands; f32 everywhere else.
    x_bf16 = x2d.astype(jnp.bfloat16)
    w1_bf16 = w1.astype(jnp.bfloat16)
    w2 = w2.astype(jnp.float32)
    w3t = w3t.astype(jnp.float32)
    b1 = b1.astype(jnp.float32)
    b2 = b2.astype(jnp.float32)
    b3 = b3.astype(jnp.float32)

    weight_bytes = w1_bf16.size * 2 + (w2.size + w3t.size + b1.size + b2.size + b3.size) * 4
    x_buf_bytes = 2 * tn * d * 2            # double-buffered bf16 x tile
    out_buf_bytes = 2 * tn * 4              # double-buffered f32 output row
    vmem_limit = int(min(48 << 20,
                         max(32 << 20,
                             x_buf_bytes + out_buf_bytes + weight_bytes + (4 << 20))))

    out_rows = pl.pallas_call(
        _mlp_kernel,
        out_shape=jax.ShapeDtypeStruct((num_tiles, 1, tn), jnp.float32),
        grid=(num_tiles,),
        in_specs=[
            pl.BlockSpec((tn, d), lambda i: (i, 0)),         # x: streamed per row tile
            pl.BlockSpec(w1_bf16.shape, lambda i: (0, 0)),   # weights/biases: resident
            pl.BlockSpec(b1.shape, lambda i: (0, 0)),
            pl.BlockSpec(w2.shape, lambda i: (0, 0)),
            pl.BlockSpec(b2.shape, lambda i: (0, 0)),
            pl.BlockSpec(w3t.shape, lambda i: (0, 0)),
            pl.BlockSpec(b3.shape, lambda i: (0, 0)),
        ],
        out_specs=pl.BlockSpec((1, 1, tn), lambda i: (i, 0, 0)),
        compiler_params=pltpu.CompilerParams(
            dimension_semantics=("parallel",),   # shards row tiles across v7x's 2 TCs
            vmem_limit_bytes=vmem_limit,
        ),
    )(x_bf16, w1_bf16, b1, w2, b2, w3t, b3)

    return out_rows.reshape(-1)[:n].reshape(n, 1)


def init_params(key, embedding_dim):
    """Deterministic init matching nn.Linear shapes.

    w1, w2 are stored as (in, out); the last layer is stored as w3t = (1, D//16),
    i.e. PyTorch's native (out_features, in_features) orientation, so the kernel
    can contract it lane-dense.
    """
    d1, d2, d3 = embedding_dim, embedding_dim // 4, embedding_dim // 16
    keys = jax.random.split(key, 6)

    def linear_init(kw, kb, fan_in, fan_out, transpose_w=False):
        bound = 1.0 / jnp.sqrt(fan_in)
        shape = (fan_out, fan_in) if transpose_w else (fan_in, fan_out)
        w = jax.random.uniform(kw, shape, jnp.float32, -bound, bound)
        b = jax.random.uniform(kb, (1, fan_out), jnp.float32, -bound, bound)
        return w, b

    w1, b1 = linear_init(keys[0], keys[1], d1, d2)
    w2, b2 = linear_init(keys[2], keys[3], d2, d3)
    w3t, b3 = linear_init(keys[4], keys[5], d3, 1, transpose_w=True)
    return (w1, b1, w2, b2, w3t, b3)


def reference_forward(x, params, embedding_dim):
    """Pure-JAX reference with the same bf16 layer-1 inputs as the kernel."""
    w1, b1, w2, b2, w3t, b3 = params
    x2d = x.reshape((-1, embedding_dim))
    h1 = jnp.dot(x2d.astype(jnp.bfloat16), w1.astype(jnp.bfloat16),
                 preferred_element_type=jnp.float32) + b1
    h1 = jnp.maximum(h1, 0.0)
    h2 = jnp.maximum(jnp.dot(h1, w2, preferred_element_type=jnp.float32) + b2, 0.0)
    return jnp.dot(h2, w3t.T, preferred_element_type=jnp.float32) + b3


if __name__ == "__main__":
    embedding_dim = 32  # -> hidden dims 8, 2, 1
    key = jax.random.PRNGKey(0)
    k_x, k_p = jax.random.split(key)

    # Input analogous to (batch=2, seq=4, embedding_dim=32); forward flattens to (8, 32).
    x = jax.random.normal(k_x, (2, 4, embedding_dim), dtype=jnp.float32)
    params = init_params(k_p, embedding_dim)

    out = dense_network_forward(x, params, embedding_dim=embedding_dim)
    out = jax.block_until_ready(out)

    ref = reference_forward(x, params, embedding_dim)
    assert out.shape == (8, 1), out.shape
    assert jnp.allclose(out, ref, atol=2e-2, rtol=2e-2), "mismatch vs reference"

    print("KERNEL_OK")
</pallas_src>

<mosaic_0001>
module attributes {stable_mosaic.version = 11 : i64} {
  func.func @_mlp_kernel(%arg0: i32, %arg1: memref<8x32xbf16, #tpu.memory_space<vmem>>, %arg2: memref<32x8xbf16, #tpu.memory_space<vmem>>, %arg3: memref<1x8xf32, #tpu.memory_space<vmem>>, %arg4: memref<8x2xf32, #tpu.memory_space<vmem>>, %arg5: memref<1x2xf32, #tpu.memory_space<vmem>>, %arg6: memref<1x2xf32, #tpu.memory_space<vmem>>, %arg7: memref<1x1xf32, #tpu.memory_space<vmem>>, %arg8: memref<1x1x8xf32, #tpu.memory_space<vmem>>) attributes {dimension_semantics = [#tpu.dimension_semantics<parallel>], iteration_bounds = array<i64: 1>, scalar_prefetch = 0 : i64, scratch_operands = 0 : i64, tpu.core_type = #tpu.core_type<tc>, window_params = [{transform_indices = @transform_0, window_bounds = array<i64: 8, 32>}, {pipeline_mode = #tpu.pipeline_mode<synchronous>, transform_indices = @transform_1, window_bounds = array<i64: 32, 8>}, {pipeline_mode = #tpu.pipeline_mode<synchronous>, transform_indices = @transform_2, window_bounds = array<i64: 1, 8>}, {pipeline_mode = #tpu.pipeline_mode<synchronous>, transform_indices = @transform_3, window_bounds = array<i64: 8, 2>}, {pipeline_mode = #tpu.pipeline_mode<synchronous>, transform_indices = @transform_4, window_bounds = array<i64: 1, 2>}, {pipeline_mode = #tpu.pipeline_mode<synchronous>, transform_indices = @transform_5, window_bounds = array<i64: 1, 2>}, {pipeline_mode = #tpu.pipeline_mode<synchronous>, transform_indices = @transform_6, window_bounds = array<i64: 1, 1>}, {transform_indices = @transform_7, window_bounds = array<i64: 1, 1, 8>}]} {
    %c0 = arith.constant 0 : index
    %c0_0 = arith.constant 0 : index
    %0 = vector.load %arg1[%c0, %c0_0] : memref<8x32xbf16, #tpu.memory_space<vmem>>, vector<8x32xbf16>
    %c0_1 = arith.constant 0 : index
    %c0_2 = arith.constant 0 : index
    %1 = vector.load %arg2[%c0_1, %c0_2] : memref<32x8xbf16, #tpu.memory_space<vmem>>, vector<32x8xbf16>
    %cst = arith.constant dense<0.000000e+00> : vector<8x8xf32>
    %2 = tpu.matmul %0, %1, %cst {dimension_numbers = #tpu.dot_dimension_numbers<[1], [0], [0], [1], [0, 0, 1, 1], [], []>} : vector<8x32xbf16>, vector<32x8xbf16>, vector<8x8xf32> -> vector<8x8xf32>
    %c0_3 = arith.constant 0 : index
    %c0_4 = arith.constant 0 : index
    %3 = vector.load %arg3[%c0_3, %c0_4] : memref<1x8xf32, #tpu.memory_space<vmem>>, vector<1x8xf32>
    %4 = vector.broadcast %3 : vector<1x8xf32> to vector<8x8xf32>
    %5 = arith.addf %2, %4 : vector<8x8xf32>
    %cst_5 = arith.constant 0.000000e+00 : f32
    %6 = vector.broadcast %cst_5 : f32 to vector<8x8xf32>
    %7 = arith.maximumf %5, %6 : vector<8x8xf32>
    %c0_6 = arith.constant 0 : index
    %c0_7 = arith.constant 0 : index
    %8 = vector.load %arg4[%c0_6, %c0_7] : memref<8x2xf32, #tpu.memory_space<vmem>>, vector<8x2xf32>
    %cst_8 = arith.constant dense<0.000000e+00> : vector<8x2xf32>
    %9 = tpu.matmul %7, %8, %cst_8 {dimension_numbers = #tpu.dot_dimension_numbers<[1], [0], [0], [1], [0, 0, 1, 1], [], []>} : vector<8x8xf32>, vector<8x2xf32>, vector<8x2xf32> -> vector<8x2xf32>
    %c0_9 = arith.constant 0 : index
    %c0_10 = arith.constant 0 : index
    %10 = vector.load %arg5[%c0_9, %c0_10] : memref<1x2xf32, #tpu.memory_space<vmem>>, vector<1x2xf32>
    %11 = vector.broadcast %10 : vector<1x2xf32> to vector<8x2xf32>
    %12 = arith.addf %9, %11 : vector<8x2xf32>
    %cst_11 = arith.constant 0.000000e+00 : f32
    %13 = vector.broadcast %cst_11 : f32 to vector<8x2xf32>
    %14 = arith.maximumf %12, %13 : vector<8x2xf32>
    %c0_12 = arith.constant 0 : index
    %c0_13 = arith.constant 0 : index
    %15 = vector.load %arg6[%c0_12, %c0_13] : memref<1x2xf32, #tpu.memory_space<vmem>>, vector<1x2xf32>
    %cst_14 = arith.constant dense<0.000000e+00> : vector<1x8xf32>
    %16 = tpu.matmul %15, %14, %cst_14 {dimension_numbers = #tpu.dot_dimension_numbers<[1], [1], [0], [0], [0, 0, 1, 0], [], []>} : vector<1x2xf32>, vector<8x2xf32>, vector<1x8xf32> -> vector<1x8xf32>
    %c0_15 = arith.constant 0 : index
    %c0_16 = arith.constant 0 : index
    %17 = vector.load %arg7[%c0_15, %c0_16] : memref<1x1xf32, #tpu.memory_space<vmem>>, vector<1x1xf32>
    %18 = vector.broadcast %17 : vector<1x1xf32> to vector<1x8xf32>
    %19 = arith.addf %16, %18 : vector<1x8xf32>
    %20 = vector.shape_cast %19 : vector<1x8xf32> to vector<1x1x8xf32>
    %c0_17 = arith.constant 0 : index
    %c0_18 = arith.constant 0 : index
    %c0_19 = arith.constant 0 : index
    %21 = vector.load %arg8[%c0_17, %c0_18, %c0_19] : memref<1x1x8xf32, #tpu.memory_space<vmem>>, vector<1x1x8xf32>
    tpu.vector_store %arg8[%c0_17, %c0_18, %c0_19], %20 {strides = array<i32>} : memref<1x1x8xf32, #tpu.memory_space<vmem>>, vector<1x1x8xf32>,
    return
  }
  func.func @transform_0(%arg0: i32) -> (i32, i32) {
    %c0_i32 = arith.constant 0 : i32
    %c0_i32_0 = arith.constant 0 : i32
    return %arg0, %c0_i32 : i32, i32
  }
  func.func @transform_1(%arg0: i32) -> (i32, i32) {
    %c0_i32 = arith.constant 0 : i32
    %c0_i32_0 = arith.constant 0 : i32
    %c0_i32_1 = arith.constant 0 : i32
    return %c0_i32, %c0_i32_0 : i32, i32
  }
  func.func @transform_2(%arg0: i32) -> (i32, i32) {
    %c0_i32 = arith.constant 0 : i32
    %c0_i32_0 = arith.constant 0 : i32
    %c0_i32_1 = arith.constant 0 : i32
    return %c0_i32, %c0_i32_0 : i32, i32
  }
  func.func @transform_3(%arg0: i32) -> (i32, i32) {
    %c0_i32 = arith.constant 0 : i32
    %c0_i32_0 = arith.constant 0 : i32
    %c0_i32_1 = arith.constant 0 : i32
    return %c0_i32, %c0_i32_0 : i32, i32
  }
  func.func @transform_4(%arg0: i32) -> (i32, i32) {
    %c0_i32 = arith.constant 0 : i32
    %c0_i32_0 = arith.constant 0 : i32
    %c0_i32_1 = arith.constant 0 : i32
    return %c0_i32, %c0_i32_0 : i32, i32
  }
  func.func @transform_5(%arg0: i32) -> (i32, i32) {
    %c0_i32 = arith.constant 0 : i32
    %c0_i32_0 = arith.constant 0 : i32
    %c0_i32_1 = arith.constant 0 : i32
    return %c0_i32, %c0_i32_0 : i32, i32
  }
  func.func @transform_6(%arg0: i32) -> (i32, i32) {
    %c0_i32 = arith.constant 0 : i32
    %c0_i32_0 = arith.constant 0 : i32
    %c0_i32_1 = arith.constant 0 : i32
    return %c0_i32, %c0_i32_0 : i32, i32
  }
  func.func @transform_7(%arg0: i32) -> (i32, i32, i32) {
    %c0_i32 = arith.constant 0 : i32
    %c0_i32_0 = arith.constant 0 : i32
    %c0_i32_1 = arith.constant 0 : i32
    return %arg0, %c0_i32, %c0_i32_0 : i32, i32, i32
  }
}

</mosaic_0001>

<llo_original>
// kernel: dense_network_forward.1
$region0: #{dense_network_forward.1}
  #allocation0 [shape = 'u32[]', space=smem, size = 0x4, offset = 0x4, fixed_abs, tag = 'smem constant byte address 0x4 - core index']
  #allocation1 [shape = 'u32[144,128]{1,0:T(1,128)}', space=vmem, size = 0x12000, scoped, tag = 'internal scratch']
  #allocation2 [shape = 'f32[1,1]{1,0:T(1,128)S(1)}', space=vmem, size = 0x200, scoped, tag = 'scoped memory for dense_network_forward.1']
  %s0 = inlined_call_operand.vmem [shape: bf16[8,32], index: 0, kind: input, shape index: {}]
  %s1 = inlined_call_operand.vmem [shape: bf16[32,8], index: 1, kind: input, shape index: {}]
  %s2 = inlined_call_operand.vmem [shape: f32[1,8], index: 2, kind: input, shape index: {}]
  %s3 = inlined_call_operand.vmem [shape: f32[8,2], index: 3, kind: input, shape index: {}]
  %s4 = inlined_call_operand.vmem [shape: f32[1,2], index: 4, kind: input, shape index: {}]
  %s5 = inlined_call_operand.vmem [shape: f32[1,2], index: 5, kind: input, shape index: {}]
  %s6 = inlined_call_operand.<no memory space> [shape: f32[1,1], index: 6, kind: input, shape index: {}]
  %s7 = inlined_call_operand.hbm [shape: f32[1,1,8], index: 7, kind: output, shape index: {}]
  %s8 = sld [smem:[#allocation0]]
  $region38: #{dense_network_forward.1} parent=0
    _
  %s10 = ssub.s32 1, %s8
  %s11 = scalar_select 0, %s10, %s8
  %v12 = vstv %s6
  %13 = vst [vmem:[#allocation2] sm:$0x1] %v12
  $region1: #{dense_network_forward.1} parent=0
    #allocation3 [shape = 'u8[512]{0}', space=vmem, size = 0x400, scoped, tag = 'output window, operand 0, single buffered']
    #allocation4 [shape = 's32[1]{0}', space=sflag, size = 0x4, scoped, tag = 'scoped memory for dense_network_forward.1']
    %14 = vsyncpa [#allocation4], 0
    // Predicated region
    $region2: #{dense_network_forward.1} parent=1 // pred_check
      _
    $region3: #{dense_network_forward.1} parent=1 // pred_check_branch
      %16 = sbr.rel (0) target = $region5
    $region4: #{dense_network_forward.1} parent=1 // pred_region
      _
    $region5: #{dense_network_forward.1} parent=1 // pred_fallthru
      _
    // Predicated region
    $region6: #{dense_network_forward.1} parent=1 // pred_check
      _
    $region7: #{dense_network_forward.1} parent=1 // pred_check_branch
      %18 = sbr.rel (0) target = $region9
    $region8: #{dense_network_forward.1} parent=1 // pred_region
      _
    $region9: #{dense_network_forward.1} parent=1 // pred_fallthru
      _
    // Predicated region
    $region10: #{dense_network_forward.1} parent=1 // pred_check
      _
    $region11: #{dense_network_forward.1} parent=1 // pred_check_branch
      %20 = sbr.rel (0) target = $region13
    $region12: #{dense_network_forward.1} parent=1 // pred_region
      _
    $region13: #{dense_network_forward.1} parent=1 // pred_fallthru
      _
    // Predicated region
    $region14: #{dense_network_forward.1} parent=1 // pred_check
      _
    $region15: #{dense_network_forward.1} parent=1 // pred_check_branch
      %22 = sbr.rel (0) target = $region17
    $region16: #{dense_network_forward.1} parent=1 // pred_region
      _
    $region17: #{dense_network_forward.1} parent=1 // pred_fallthru
      _
    // Predicated region
    $region18: #{dense_network_forward.1} parent=1 // pred_check
      _
    $region19: #{dense_network_forward.1} parent=1 // pred_check_branch
      %24 = sbr.rel (0) target = $region21
    $region20: #{dense_network_forward.1} parent=1 // pred_region
      _
    $region21: #{dense_network_forward.1} parent=1 // pred_fallthru
      _
    // Predicated region
    $region22: #{dense_network_forward.1} parent=1 // pred_check
      _
    $region23: #{dense_network_forward.1} parent=1 // pred_check_branch
      %26 = sbr.rel (0) target = $region25
    $region24: #{dense_network_forward.1} parent=1 // pred_region
      _
    $region25: #{dense_network_forward.1} parent=1 // pred_fallthru
      _
    // Predicated region
    $region26: #{dense_network_forward.1} parent=1 // pred_check
      _
    $region27: #{dense_network_forward.1} parent=1 // pred_check_branch
      %28 = sbr.rel (0) target = $region29
    $region28: #{dense_network_forward.1} parent=1 // pred_region
      _
    $region29: #{dense_network_forward.1} parent=1 // pred_fallthru
      _
    %v30 = vld [vmem:[%s0] sm:$0xf]
    %v31 = vld [vmem:[%s1] sm:$0xf]
    %v32 = vld [vmem:[%s1 + $0x4] sm:$0xf]
    %v33 = vld [vmem:[%s1 + $0x8] sm:$0xf]
    %v34 = vld [vmem:[%s1 + $0xc] sm:$0xf]
    %v35 = vld [vmem:[%s2] sm:$0x1]
    %v37 = vlaneseq
    %v38 = vshrl.u32 %v37, 7
    %v39 = vsub.s32 0, %v38
    %v40 = vrot.slane %v35, %v39
    %v46 = vunpack.c.l.b16 %v31
    %v47 = vunpack.c.l.b16 %v32
    %v48 = vunpack.c.l.b16 %v33
    %v49 = vunpack.c.l.b16 %v34
    %v50 = vpack.c.b16 %v47, %v46
    %v51 = vpack.c.b16 %v49, %v48
    %vm54 = vcmask 261120
    %v56 = vsel %vm54, %v30, 0
    %58 = vmatprep.subr.bf16.mxu0 0
    %59 = vmatpush1.bf16.msra.mxu0 0
    %60 = vmatprep.subr.bf16.mxu0 0
    %61 = vmatpush1.bf16.msra.mxu0 0
    %62 = vmatprep.subr.bf16.mxu0 0
    %63 = vmatpush1.bf16.msra.mxu0 0
    %64 = vmatprep.subr.bf16.mxu0 0
    %65 = vmatpush1.bf16.msra.mxu0 0
    %66 = vmatprep.subr.bf16.mxu0 0
    %67 = vmatpush1.bf16.msra.mxu0 0
    %68 = vmatprep.subr.bf16.mxu0 0
    %69 = vmatpush1.bf16.msra.mxu0 0
    %70 = vmatprep.subr.bf16.mxu0 0
    %71 = vmatpush1.bf16.msra.mxu0 %v51
    %72 = vmatprep.subr.bf16.mxu0 0
    %73 = vmatpush1.bf16.msra.mxu0 %v50
    %74 = vmatprep.subr.bf16.mxu0 0
    %75 = vmatpush2.bf16.msra.mxu0 0
    %76 = vmatprep.subr.bf16.mxu0 0
    %77 = vmatpush2.bf16.msra.mxu0 0
    %78 = vmatprep.subr.bf16.mxu0 0
    %79 = vmatpush2.bf16.msra.mxu0 0
    %80 = vmatprep.subr.bf16.mxu0 0
    %81 = vmatpush2.bf16.msra.mxu0 0
    %82 = vmatprep.subr.bf16.mxu0 0
    %83 = vmatpush2.bf16.msra.mxu0 0
    %84 = vmatprep.subr.bf16.mxu0 0
    %85 = vmatpush2.bf16.msra.mxu0 0
    %86 = vmatprep.subr.bf16.mxu0 0
    %87 = vmatpush2.bf16.msra.mxu0 0
    %88 = vmatprep.subr.bf16.mxu0 0
    %89 = vmatpush2.bf16.msra.mxu0 0
    %90 = vmatprep.mubr.bf16.mxu0 0
    %91 = vmatmul.mubr.bf16.gmra.mxu0 %v56
    %v92 = vpop.f32.mrf.mxu0
    %v93 = vadd.f32 %v40, %v92
    %v94 = vpop.f32.mrf.mxu0
    %v95 = vpop.f32.mrf.mxu0
    %v96 = vpop.f32.mrf.mxu0
    %97 = vdwg.mxu0
    %v98 = vmax.f32 %v93, 0.0
    %v99 = vld [vmem:[%s3] sm:$0xff]
    %v100 = vld [vmem:[%s4] sm:$0x1]
    %v102 = vlaneseq
    %v103 = vshrl.u32 %v102, 7
    %v104 = vsub.s32 0, %v103
    %v105 = vrot.slane %v100, %v104
    %vm107 = vcmask 64512
    %v109 = vsel %vm107, %v98, 0
    %111 = vmatprep.subr.mxu0 0.0
    %112 = vmatpush1.msra.mxu0 0.0
    %113 = vmatprep.subr.mxu0 0.0
    %114 = vmatpush1.msra.mxu0 0.0
    %115 = vmatprep.subr.mxu0 0.0
    %116 = vmatpush1.msra.mxu0 0.0
    %117 = vmatprep.subr.mxu0 0.0
    %118 = vmatpush1.msra.mxu0 0.0
    %119 = vmatprep.subr.mxu0 0.0
    %120 = vmatpush1.msra.mxu0 0.0
    %121 = vmatprep.subr.mxu0 0.0
    %122 = vmatpush1.msra.mxu0 0.0
    %123 = vmatprep.subr.mxu0 0.0
    %124 = vmatpush1.msra.mxu0 0.0
    %125 = vmatprep.subr.mxu0 0.0
    %126 = vmatpush1.msra.mxu0 0.0
    %127 = vmatprep.subr.mxu0 0.0
    %128 = vmatpush1.msra.mxu0 0.0
    %129 = vmatprep.subr.mxu0 0.0
    %130 = vmatpush1.msra.mxu0 0.0
    %131 = vmatprep.subr.mxu0 0.0
    %132 = vmatpush1.msra.mxu0 0.0
    %133 = vmatprep.subr.mxu0 0.0
    %134 = vmatpush1.msra.mxu0 0.0
    %135 = vmatprep.subr.mxu0 0.0
    %136 = vmatpush1.msra.mxu0 0.0
    %137 = vmatprep.subr.mxu0 0.0
    %138 = vmatpush1.msra.mxu0 0.0
    %139 = vmatprep.subr.mxu0 0.0
    %140 = vmatpush1.msra.mxu0 0.0
    %141 = vmatprep.subr.mxu0 0.0
    %142 = vmatpush1.msra.mxu0 %v99
    %143 = vmatprep.subr.mxu0 0.0
    %144 = vmatpush2.msra.mxu0 0.0
    %145 = vmatprep.subr.mxu0 0.0
    %146 = vmatpush2.msra.mxu0 0.0
    %147 = vmatprep.subr.mxu0 0.0
    %148 = vmatpush2.msra.mxu0 0.0
    %149 = vmatprep.subr.mxu0 0.0
    %150 = vmatpush2.msra.mxu0 0.0
    %151 = vmatprep.subr.mxu0 0.0
    %152 = vmatpush2.msra.mxu0 0.0
    %153 = vmatprep.subr.mxu0 0.0
    %154 = vmatpush2.msra.mxu0 0.0
    %155 = vmatprep.subr.mxu0 0.0
    %156 = vmatpush2.msra.mxu0 0.0
    %157 = vmatprep.subr.mxu0 0.0
    %158 = vmatpush2.msra.mxu0 0.0
    %159 = vmatprep.subr.mxu0 0.0
    %160 = vmatpush2.msra.mxu0 0.0
    %161 = vmatprep.subr.mxu0 0.0
    %162 = vmatpush2.msra.mxu0 0.0
    %163 = vmatprep.subr.mxu0 0.0
    %164 = vmatpush2.msra.mxu0 0.0
    %165 = vmatprep.subr.mxu0 0.0
    %166 = vmatpush2.msra.mxu0 0.0
    %167 = vmatprep.subr.mxu0 0.0
    %168 = vmatpush2.msra.mxu0 0.0
    %169 = vmatprep.subr.mxu0 0.0
    %170 = vmatpush2.msra.mxu0 0.0
    %171 = vmatprep.subr.mxu0 0.0
    %172 = vmatpush2.msra.mxu0 0.0
    %173 = vmatprep.subr.mxu0 0.0
    %174 = vmatpush2.msra.mxu0 0.0
    %175 = vmatprep.mubr.f32.mxu0 0.0
    %176 = vmatmul.mubr.f32.gmra.mxu0 %v109
    %v177 = vpop.f32.mrf.mxu0
    %v178 = vadd.f32 %v105, %v177
    %v179 = vpop.f32.mrf.mxu0
    %180 = vdwg.mxu0
    %v181 = vmax.f32 %v178, 0.0
    %v182 = vld [vmem:[%s5] sm:$0x1]
    %v183 = vld [vmem:[#allocation2] sm:$0x1]
    %185 = vset.pattern.permute.xlu0 0
    %186 = vperm.xlu0 %185, %v183
    %v187 = vpop.permute.xlu0 %186
    %v189 = vlaneseq
    %v190 = vshrl.u32 %v189, 7
    %v191 = vsub.s32 0, %v190
    %v192 = vrot.slane %v187, %v191
    %vm193 = vcmask 15360
    %v195 = vsel %vm193, %v182, 0
    %v198 = vsel %vm193, %v181, 0
    %200 = vmatprep.subr.mxu0 0.0
    %201 = vmatpush1.xpose.msra.mxu0 0.0
    %202 = vmatprep.subr.mxu0 0.0
    %203 = vmatpush1.xpose.msra.mxu0 0.0
    %204 = vmatprep.subr.mxu0 0.0
    %205 = vmatpush1.xpose.msra.mxu0 0.0
    %206 = vmatprep.subr.mxu0 0.0
    %207 = vmatpush1.xpose.msra.mxu0 0.0
    %208 = vmatprep.subr.mxu0 0.0
    %209 = vmatpush1.xpose.msra.mxu0 0.0
    %210 = vmatprep.subr.mxu0 0.0
    %211 = vmatpush1.xpose.msra.mxu0 0.0
    %212 = vmatprep.subr.mxu0 0.0
    %213 = vmatpush1.xpose.msra.mxu0 0.0
    %214 = vmatprep.subr.mxu0 0.0
    %215 = vmatpush1.xpose.msra.mxu0 0.0
    %216 = vmatprep.subr.mxu0 0.0
    %217 = vmatpush1.xpose.msra.mxu0 0.0
    %218 = vmatprep.subr.mxu0 0.0
    %219 = vmatpush1.xpose.msra.mxu0 0.0
    %220 = vmatprep.subr.mxu0 0.0
    %221 = vmatpush1.xpose.msra.mxu0 0.0
    %222 = vmatprep.subr.mxu0 0.0
    %223 = vmatpush1.xpose.msra.mxu0 0.0
    %224 = vmatprep.subr.mxu0 0.0
    %225 = vmatpush1.xpose.msra.mxu0 0.0
    %226 = vmatprep.subr.mxu0 0.0
    %227 = vmatpush1.xpose.msra.mxu0 0.0
    %228 = vmatprep.subr.mxu0 0.0
    %229 = vmatpush1.xpose.msra.mxu0 0.0
    %230 = vmatprep.subr.mxu0 0.0
    %231 = vmatpush1.xpose.msra.mxu0 %v198
    %232 = vmatprep.subr.mxu0 0.0
    %233 = vmatpush2.xpose.msra.mxu0 0.0
    %234 = vmatprep.subr.mxu0 0.0
    %235 = vmatpush2.xpose.msra.mxu0 0.0
    %236 = vmatprep.subr.mxu0 0.0
    %237 = vmatpush2.xpose.msra.mxu0 0.0
    %238 = vmatprep.subr.mxu0 0.0
    %239 = vmatpush2.xpose.msra.mxu0 0.0
    %240 = vmatprep.subr.mxu0 0.0
    %241 = vmatpush2.xpose.msra.mxu0 0.0
    %242 = vmatprep.subr.mxu0 0.0
    %243 = vmatpush2.xpose.msra.mxu0 0.0
    %244 = vmatprep.subr.mxu0 0.0
    %245 = vmatpush2.xpose.msra.mxu0 0.0
    %246 = vmatprep.subr.mxu0 0.0
    %247 = vmatpush2.xpose.msra.mxu0 0.0
    %248 = vmatprep.subr.mxu0 0.0
    %249 = vmatpush2.xpose.msra.mxu0 0.0
    %250 = vmatprep.subr.mxu0 0.0
    %251 = vmatpush2.xpose.msra.mxu0 0.0
    %252 = vmatprep.subr.mxu0 0.0
    %253 = vmatpush2.xpose.msra.mxu0 0.0
    %254 = vmatprep.subr.mxu0 0.0
    %255 = vmatpush2.xpose.msra.mxu0 0.0
    %256 = vmatprep.subr.mxu0 0.0
    %257 = vmatpush2.xpose.msra.mxu0 0.0
    %258 = vmatprep.subr.mxu0 0.0
    %259 = vmatpush2.xpose.msra.mxu0 0.0
    %260 = vmatprep.subr.mxu0 0.0
    %261 = vmatpush2.xpose.msra.mxu0 0.0
    %262 = vmatprep.subr.mxu0 0.0
    %263 = vmatpush2.xpose.msra.mxu0 0.0
    %264 = vmatprep.mubr.f32.mxu0 0.0
    %265 = vmatmul.mubr.f32.gmra.mxu0 %v195
    %v266 = vpop.f32.mrf.mxu0
    %v267 = vadd.f32 %v192, %v266
    %v268 = vpop.f32.mrf.mxu0
    %269 = vdwg.mxu0
    %vm270 = vcmask 57344
    %271 = vst.msk [vmem:[#allocation3] sm:$0x1] %vm270, %v267
    // Predicated region
    $region30: #{dense_network_forward.1} parent=1 // pred_check
      _
    $region31: #{dense_network_forward.1} parent=1 // pred_check_branch
      %273 = sbr.rel (0) target = $region33
    $region32: #{dense_network_forward.1} parent=1 // pred_region
      %s275 = ssub.s32 16, 16
      %276 = vsyncadd [#allocation4], %s275
      %s278 = sshll.u32 [#allocation3], 4
      %s279 = int_to_ptr.vmem [resolvable:$true] %s278
      %281 = dma.vmem_to_hbm [thread:$0]  %s279, 16, %s7, [#allocation4]
    $region33: #{dense_network_forward.1} parent=1 // pred_fallthru
      _
    // Predicated region
    $region34: #{dense_network_forward.1} parent=1 // pred_check
      _
    $region35: #{dense_network_forward.1} parent=1 // pred_check_branch
      %283 = sbr.rel (0) target = $region37
    $region36: #{dense_network_forward.1} parent=1 // pred_region
      %284 = dma.done [#allocation4], 16
    $region37: #{dense_network_forward.1} parent=1 // pred_fallthru
      _
    %285 = vsyncpa [#allocation4], 1

</llo_original>
